<compile_context>
chip_gen: v7x
topology: tpu7x:2x2x1
jax: 0.10.0
libtpu: 0.0.40
codegen_flags: <defaults>
</compile_context>

<pallas_src>
import math

import jax
import jax.numpy as jnp
from jax.experimental import pallas as pl
from jax.experimental.pallas import tpu as pltpu


def _fhat1_add_kernel(x_ref, wb_ref, o_ref):
    # x_ref: (tile_n, tile_t); wb_ref: (1, tile_t) broadcast over rows.
    o_ref[...] = x_ref[...] + wb_ref[...]


def _cdiv(a, b):
    return -(-a // b)


def _round_up(v, m):
    return _cdiv(v, m) * m


def _sublane_rows(itemsize):
    # f32 -> 8, bf16 -> 16, int8/fp8 -> 32 (sublane packing).
    return max(8, 32 // max(1, itemsize))


def _vmem_capacity_bytes():
    try:
        info = pltpu.get_tpu_info()
        cap = getattr(info, "vmem_capacity_bytes", None)
        if cap:
            return int(cap)
    except Exception:
        pass
    return 128 << 20  # conservative v5e/v6e-style fallback


def fhat1_add(x, w_1, b0, *, force_pallas=False, alias_input=False):
    """out = b0 + w_1 + x, with the (t,) params broadcast over the n axis."""
    n, t = x.shape

    # PyTorch-style type promotion (e.g. bf16 x + f32 params -> f32 out).
    out_dtype = jnp.result_type(x.dtype, w_1.dtype, b0.dtype)
    if x.dtype != out_dtype:
        x = x.astype(out_dtype)
    itemsize = jnp.dtype(out_dtype).itemsize

    # Fold both per-t parameters into a single resident (1, t) vector — a
    # t-sized op, NOT the "pre-scale the big input" anti-pattern.
    wb = (w_1.astype(out_dtype) + b0.astype(out_dtype)).reshape(1, t)

    # Tiny-problem fast path: standalone pallas_call overhead dwarfs a few-KiB
    # elementwise op; let XLA's fused add handle it.
    if not force_pallas and (x.size * itemsize) < (1 << 20):
        return x + wb

    # ---- lane-dense repack when t is not a multiple of 128 -----------------
    n_eff, t_eff = n, t
    x_eff, wb_eff = x, wb
    repacked = False
    if t % 128 != 0:
        k = 128 // math.gcd(t, 128)
        if k > 1 and n % k == 0:
            n_eff, t_eff = n // k, t * k
            x_eff = x.reshape(n_eff, t_eff)
            wb_eff = jnp.tile(wb, (1, k))
            repacked = True

    # ---- per-generation block sizing / VMEM budget --------------------------
    sub = _sublane_rows(itemsize)
    vmem_cap = _vmem_capacity_bytes()
    pipeline_budget = min(vmem_cap // 2, 32 << 20)       # 4 double-buffered blocks
    target_block = (6 << 20) if vmem_cap <= (64 << 20) else (4 << 20)
    max_block = min(target_block, pipeline_budget // 4)

    row_bytes = t_eff * itemsize

    if sub * row_bytes <= max_block:
        # Common case: 1-D grid over rows, full-width (lane-dense) last dim.
        rows = max(1, max_block // row_bytes)
        tile_n = max(sub, (rows // sub) * sub)
        if n_eff >= 4 * sub:
            # Keep >=4 grid steps so both v7x TCs participate and DMA overlaps.
            tile_n = min(tile_n, _round_up(_cdiv(n_eff, 4), sub))
        if tile_n >= n_eff:
            tile_n = n_eff                                # full extent, grid=1
        tile_t = t_eff
        grid = (_cdiv(n_eff, tile_n),)
        in_specs = [
            pl.BlockSpec((tile_n, tile_t), lambda i: (i, 0)),
            pl.BlockSpec((1, tile_t), lambda i: (0, 0)),   # resident params
        ]
        out_spec = pl.BlockSpec((tile_n, tile_t), lambda i: (i, 0))
        dims = ("parallel",)
    else:
        # Very wide t: tile the lane axis too (128-multiples) to stay in VMEM.
        lanes = max(128, (max_block // (sub * itemsize) // 128) * 128)
        full_lanes = t_eff if t_eff % 128 == 0 else (t_eff // 128) * 128
        tile_t = max(128, min(lanes, full_lanes))
        tile_n = sub if n_eff > sub else n_eff
        grid = (_cdiv(n_eff, tile_n), _cdiv(t_eff, tile_t))
        in_specs = [
            pl.BlockSpec((tile_n, tile_t), lambda i, j: (i, j)),
            pl.BlockSpec((1, tile_t), lambda i, j: (0, j)),
        ]
        out_spec = pl.BlockSpec((tile_n, tile_t), lambda i, j: (i, j))
        dims = ("parallel", "parallel")

    block_bytes = tile_n * tile_t * itemsize
    required = 4 * block_bytes + 2 * tile_t * itemsize + (2 << 20)
    vmem_limit = int(min(max(required, 32 << 20), vmem_cap * 3 // 4))

    cost = pl.CostEstimate(
        flops=2 * n_eff * t_eff,
        transcendentals=0,
        bytes_accessed=2 * n_eff * t_eff * itemsize + t_eff * itemsize,
    )

    io_aliases = {0: 0} if alias_input else {}

    out = pl.pallas_call(
        _fhat1_add_kernel,
        out_shape=jax.ShapeDtypeStruct((n_eff, t_eff), out_dtype),
        grid_spec=pltpu.PrefetchScalarGridSpec(
            num_scalar_prefetch=0,
            grid=grid,
            in_specs=in_specs,
            out_specs=out_spec,
        ),
        compiler_params=pltpu.CompilerParams(
            dimension_semantics=dims,
            vmem_limit_bytes=vmem_limit,
        ),
        cost_estimate=cost,
        input_output_aliases=io_aliases,
    )(x_eff, wb_eff)

    if repacked:
        out = out.reshape(n, t)
    return out


if __name__ == "__main__":
    # Small shapes consistent with the module's (n x t) input convention.
    n, t = 16, 256
    weight_dim = [(t,), (t,)]              # shapes of w_1 and b0
    init_vals = [(0.0, 0.1), (1.0, 0.05)]  # (mean, std) for each parameter

    key = jax.random.PRNGKey(0)
    kx, kw, kb = jax.random.split(key, 3)

    x = jax.random.normal(kx, (n, t), dtype=jnp.float32)

    # Deterministic parameter init matching torch.nn.init.normal_(mean, std).
    w_1 = init_vals[0][0] + init_vals[0][1] * jax.random.normal(
        kw, weight_dim[0], dtype=jnp.float32)
    b0 = init_vals[1][0] + init_vals[1][1] * jax.random.normal(
        kb, weight_dim[1], dtype=jnp.float32)

    # force_pallas=True so this small self-test actually exercises the kernel.
    out = fhat1_add(x, w_1, b0, force_pallas=True)
    out = jax.block_until_ready(out)

    # Reference (plain JAX, same semantics as the PyTorch forward): b0 + w_1 + x
    ref = b0 + w_1 + x
    assert out.shape == ref.shape and out.dtype == ref.dtype
    assert jnp.allclose(out, ref, atol=1e-6, rtol=1e-6)

    print("KERNEL_OK")
</pallas_src>

<mosaic_0001>
module attributes {stable_mosaic.version = 11 : i64} {
  func.func @_fhat1_add_kernel(%arg0: i32, %arg1: memref<16x256xf32, #tpu.memory_space<vmem>>, %arg2: memref<1x256xf32, #tpu.memory_space<vmem>>, %arg3: memref<16x256xf32, #tpu.memory_space<vmem>>) attributes {dimension_semantics = [#tpu.dimension_semantics<parallel>], iteration_bounds = array<i64: 1>, scalar_prefetch = 0 : i64, scratch_operands = 0 : i64, tpu.core_type = #tpu.core_type<tc>, window_params = [{transform_indices = @transform_0, window_bounds = array<i64: 16, 256>}, {pipeline_mode = #tpu.pipeline_mode<synchronous>, transform_indices = @transform_1, window_bounds = array<i64: 1, 256>}, {transform_indices = @transform_2, window_bounds = array<i64: 16, 256>}]} {
    %c0 = arith.constant 0 : index
    %c0_0 = arith.constant 0 : index
    %0 = vector.load %arg1[%c0, %c0_0] : memref<16x256xf32, #tpu.memory_space<vmem>>, vector<16x256xf32>
    %c0_1 = arith.constant 0 : index
    %c0_2 = arith.constant 0 : index
    %1 = vector.load %arg2[%c0_1, %c0_2] : memref<1x256xf32, #tpu.memory_space<vmem>>, vector<1x256xf32>
    %2 = vector.broadcast %1 : vector<1x256xf32> to vector<16x256xf32>
    %3 = arith.addf %0, %2 : vector<16x256xf32>
    %c0_3 = arith.constant 0 : index
    %c0_4 = arith.constant 0 : index
    %4 = vector.load %arg3[%c0_3, %c0_4] : memref<16x256xf32, #tpu.memory_space<vmem>>, vector<16x256xf32>
    tpu.vector_store %arg3[%c0_3, %c0_4], %3 {strides = array<i32>} : memref<16x256xf32, #tpu.memory_space<vmem>>, vector<16x256xf32>,
    return
  }
  func.func @transform_0(%arg0: i32) -> (i32, i32) {
    %c0_i32 = arith.constant 0 : i32
    %c0_i32_0 = arith.constant 0 : i32
    return %arg0, %c0_i32 : i32, i32
  }
  func.func @transform_1(%arg0: i32) -> (i32, i32) {
    %c0_i32 = arith.constant 0 : i32
    %c0_i32_0 = arith.constant 0 : i32
    %c0_i32_1 = arith.constant 0 : i32
    return %c0_i32, %c0_i32_0 : i32, i32
  }
  func.func @transform_2(%arg0: i32) -> (i32, i32) {
    %c0_i32 = arith.constant 0 : i32
    %c0_i32_0 = arith.constant 0 : i32
    return %arg0, %c0_i32 : i32, i32
  }
}

</mosaic_0001>

<llo_original>
// kernel: tpu_custom_call.1
$region0: #{tpu_custom_call.1}
  #allocation0 [shape = 'u32[]', space=smem, size = 0x4, offset = 0x4, fixed_abs, tag = 'smem constant byte address 0x4 - core index']
  #allocation1 [shape = 'u32[144,128]{1,0:T(1,128)}', space=vmem, size = 0x12000, scoped, tag = 'internal scratch']
  %s0 = inlined_call_operand.hbm [shape: f32[16,256], index: 0, kind: input, shape index: {}]
  %s1 = inlined_call_operand.vmem [shape: f32[1,256], index: 1, kind: input, shape index: {}]
  %s2 = inlined_call_operand.hbm [shape: f32[16,256], index: 2, kind: output, shape index: {}]
  %s3 = sld [smem:[#allocation0]]
  $region22: #{tpu_custom_call.1} parent=0
    _
  %s5 = ssub.s32 1, %s3
  %s6 = scalar_select 0, %s5, %s3
  $region1: #{tpu_custom_call.1} parent=0
    #allocation2 [shape = 'u8[16384]{0}', space=vmem, size = 0x4000, scoped, tag = 'input window, operand 0, single buffered']
    #allocation3 [shape = 's32[1]{0}', space=sflag, size = 0x4, scoped, tag = 'scoped memory for tpu_custom_call.1']
    #allocation4 [shape = 's32[1]{0}', space=sflag, size = 0x4, scoped, tag = 'scoped memory for tpu_custom_call.1']
    #allocation5 [shape = 'u8[16384]{0}', space=vmem, size = 0x4000, scoped, tag = 'output window, operand 0, single buffered']
    %7 = vsyncpa [#allocation3], 0
    %8 = vsyncpa [#allocation4], 0
    // Predicated region
    $region2: #{tpu_custom_call.1} parent=1 // pred_check
      _
    $region3: #{tpu_custom_call.1} parent=1 // pred_check_branch
      %10 = sbr.rel (0) target = $region5
    $region4: #{tpu_custom_call.1} parent=1 // pred_region
      %s12 = ssub.s32 512, 512
      %13 = vsyncadd [#allocation3], %s12
      %s14 = sshll.u32 [#allocation2], 4
      %s15 = int_to_ptr.vmem [resolvable:$true] %s14
      %20 = dma.hbm_to_vmem [thread:$0]  %s0, 512, %s15, [#allocation3], 256, 256, 16
    $region5: #{tpu_custom_call.1} parent=1 // pred_fallthru
      _
    // Predicated region
    $region6: #{tpu_custom_call.1} parent=1 // pred_check
      _
    $region7: #{tpu_custom_call.1} parent=1 // pred_check_branch
      %22 = sbr.rel (0) target = $region9
    $region8: #{tpu_custom_call.1} parent=1 // pred_region
      _
    $region9: #{tpu_custom_call.1} parent=1 // pred_fallthru
      _
    // Predicated region
    $region10: #{tpu_custom_call.1} parent=1 // pred_check
      _
    $region11: #{tpu_custom_call.1} parent=1 // pred_check_branch
      %24 = sbr.rel (0) target = $region13
    $region12: #{tpu_custom_call.1} parent=1 // pred_region
      %25 = dma.done [#allocation3], 512
    $region13: #{tpu_custom_call.1} parent=1 // pred_fallthru
      _
    %v26 = vld [vmem:[#allocation2] sm:$0xff]
    %v27 = vld [vmem:[#allocation2 + $0x8] sm:$0xff]
    %v28 = vld [vmem:[#allocation2 + $0x10] sm:$0xff]
    %v29 = vld [vmem:[#allocation2 + $0x18] sm:$0xff]
    %v30 = vld [vmem:[%s1] sm:$0x3]
    %v32 = vlaneseq
    %v33 = vshrl.u32 %v32, 7
    %v34 = vsub.s32 0, %v33
    %v35 = vrot.slane %v30, %v34
    %v36 = vlaneseq
    %v37 = vshrl.u32 %v36, 7
    %v38 = vsub.s32 1, %v37
    %v39 = vrot.slane %v30, %v38
    %v42 = vadd.f32 %v26, %v35
    %v43 = vadd.f32 %v27, %v39
    %v44 = vadd.f32 %v28, %v35
    %v45 = vadd.f32 %v29, %v39
    %46 = vst [vmem:[#allocation5] sm:$0xff] %v42
    %47 = vst [vmem:[#allocation5 + $0x8] sm:$0xff] %v43
    %48 = vst [vmem:[#allocation5 + $0x10] sm:$0xff] %v44
    %49 = vst [vmem:[#allocation5 + $0x18] sm:$0xff] %v45
    // Predicated region
    $region14: #{tpu_custom_call.1} parent=1 // pred_check
      _
    $region15: #{tpu_custom_call.1} parent=1 // pred_check_branch
      %51 = sbr.rel (0) target = $region17
    $region16: #{tpu_custom_call.1} parent=1 // pred_region
      %s53 = ssub.s32 512, 512
      %54 = vsyncadd [#allocation4], %s53
      %s55 = sshll.u32 [#allocation5], 4
      %s56 = int_to_ptr.vmem [resolvable:$true] %s55
      %61 = dma.vmem_to_hbm [thread:$0]  %s56, 512, %s2, [#allocation4], 256, 256, 16
    $region17: #{tpu_custom_call.1} parent=1 // pred_fallthru
      _
    // Predicated region
    $region18: #{tpu_custom_call.1} parent=1 // pred_check
      _
    $region19: #{tpu_custom_call.1} parent=1 // pred_check_branch
      %63 = sbr.rel (0) target = $region21
    $region20: #{tpu_custom_call.1} parent=1 // pred_region
      %64 = dma.done [#allocation4], 512
    $region21: #{tpu_custom_call.1} parent=1 // pred_fallthru
      _
    %65 = vsyncpa [#allocation3], 1
    %66 = vsyncpa [#allocation4], 1

</llo_original>
